<compile_context>
chip_gen: v5e
topology: v5e:2x2
jax: 0.10.0
libtpu: 0.0.40
codegen_flags: <defaults>
</compile_context>

<pallas_src>
import jax
import jax.numpy as jnp
from jax.experimental import pallas as pl
from jax.experimental.pallas import tpu as pltpu


def _sigmoid_kernel(x_ref, o_ref):
    # Compute in f32 regardless of storage dtype: exp goes to the EUP slot and
    # the divide to the VALU, both fully hidden under the block DMA.
    x32 = x_ref[...].astype(jnp.float32)
    y = 1.0 / (1.0 + jnp.exp(-x32))
    o_ref[...] = y.astype(o_ref.dtype)


_LANE_CANDIDATES = (2048, 1024, 512, 256, 128)


def _round_up(x, m):
    return (x + m - 1) // m * m


def _tpu_config():
    """Return (target_block_bytes, num_tensorcores) for the local TPU.

    Conservative defaults keep 4x double-buffering under every generation's
    default scoped-VMEM limit (v5e 16 MiB, v6e/v7x 32 MiB).
    """
    target_bytes = 3 * 1024 * 1024  # safe everywhere: 4 bufs ~= 12 MiB
    num_tc = 1
    try:
        kind = jax.devices()[0].device_kind.lower()
    except Exception:
        return target_bytes, num_tc
    if "v6" in kind:
        target_bytes = 6 * 1024 * 1024          # 4 bufs ~= 24 MiB < 32 MiB scoped
    elif "v7" in kind or "7x" in kind:
        target_bytes = 6 * 1024 * 1024          # 64 MiB physical / 32 MiB scoped
        num_tc = 2                               # two TensorCores share HBM
    return target_bytes, num_tc


def _choose_row_tile(n_rows, lane, itemsize, target_bytes, num_tc):
    """Pick the row-tile (second-minor block dim) for an (n_rows, lane) slab."""
    # Sublane packing granularity: 8 rows for 4-byte, 16 for 2-byte dtypes.
    packing = 8 * max(1, 4 // itemsize)
    rows_per_block = (target_bytes // (lane * itemsize)) // packing * packing
    rows_per_block = max(packing, rows_per_block)

    if n_rows <= rows_per_block:
        if num_tc > 1 and n_rows >= num_tc * packing:
            # Split the single block so every TensorCore gets work; prefer
            # 2 steps per core (DMA overlap) when the data allows it.
            steps = 2 * num_tc if n_rows >= 2 * num_tc * packing else num_tc
            return _round_up(pl.cdiv(n_rows, steps), packing)
        return n_rows  # one full-dim block (legal tiling, unmasked store)

    row_tile = rows_per_block
    if num_tc > 1 and pl.cdiv(n_rows, row_tile) % 2 != 0:
        # Nudge toward an even grid-step count so both cores get equal work;
        # don't shrink below half the target block (per-step overhead).
        min_tile = max(packing, rows_per_block // 2)
        tile = row_tile - packing
        while tile >= min_tile:
            if pl.cdiv(n_rows, tile) % 2 == 0:
                return tile
            tile -= packing
    return row_tile


def pallas_sigmoid(x):
    """Elementwise sigmoid; matches torch.Tensor.sigmoid() (out-of-place)."""
    orig_shape = x.shape
    if not jnp.issubdtype(x.dtype, jnp.floating):
        # Matches torch unary-op promotion: integer inputs -> float32 result.
        x = x.astype(jnp.float32)
    dtype = x.dtype
    n = x.size
    if n == 0:
        return jnp.reshape(x, orig_shape)

    # Widest lane-dense last dim that divides the flat length exactly
    # (no pad copy, no tail slice -> 1x HBM traffic each way).
    lane = None
    for cand in _LANE_CANDIDATES:
        if n % cand == 0:
            lane = cand
            break
    if lane is None:
        # Flat size not a multiple of 128: XLA's fused elementwise sigmoid is
        # already HBM-bandwidth bound; a padded Pallas path would only add traffic.
        return jax.nn.sigmoid(x)

    n_rows = n // lane
    x2d = jnp.ravel(x).reshape(n_rows, lane)

    itemsize = jnp.dtype(dtype).itemsize
    target_bytes, num_tc = _tpu_config()
    row_tile = _choose_row_tile(n_rows, lane, itemsize, target_bytes, num_tc)
    grid = (pl.cdiv(n_rows, row_tile),)  # Pallas masks a partial last block.

    out2d = pl.pallas_call(
        _sigmoid_kernel,
        out_shape=jax.ShapeDtypeStruct((n_rows, lane), dtype),
        grid_spec=pltpu.PrefetchScalarGridSpec(
            num_scalar_prefetch=0,
            grid=grid,
            in_specs=[pl.BlockSpec((row_tile, lane), lambda i: (i, 0))],
            out_specs=pl.BlockSpec((row_tile, lane), lambda i: (i, 0)),
        ),
        # "parallel" lets the runtime shard the grid axis across TensorCores on
        # multi-TC chips (v7x); on single-TC chips it is a no-op.
        # TODO(synk): experiment with pltpu.CORE_PARALLEL on v7x and verify the
        # split in xprof.
        compiler_params=pltpu.CompilerParams(
            dimension_semantics=("parallel",)),
    )(x2d)

    return out2d.reshape(orig_shape)


if __name__ == "__main__":
    key = jax.random.PRNGKey(0)

    # Main check: NCHW activation shape consistent with the module.
    x = jax.random.normal(key, (2, 4, 16, 16), dtype=jnp.float32)
    y = jax.block_until_ready(pallas_sigmoid(x))
    y_ref = jax.nn.sigmoid(x)
    assert y.shape == x.shape and y.dtype == x.dtype
    assert jnp.allclose(y, y_ref, atol=1e-6, rtol=1e-6), "f32 mismatch vs reference"

    # Non-multiple-of-128 flat size: exercises the XLA fallback (no pad copy).
    x2 = jax.random.normal(jax.random.PRNGKey(1), (3, 5, 7, 11), dtype=jnp.float32)
    y2 = jax.block_until_ready(pallas_sigmoid(x2))
    assert jnp.allclose(y2, jax.nn.sigmoid(x2), atol=1e-6, rtol=1e-6), "fallback mismatch"

    # bf16 path: f32 math inside the kernel, bf16 storage in/out.
    x3 = jax.random.normal(jax.random.PRNGKey(2), (2, 8, 32, 32), dtype=jnp.bfloat16)
    y3 = jax.block_until_ready(pallas_sigmoid(x3))
    assert y3.dtype == jnp.bfloat16
    assert jnp.allclose(y3.astype(jnp.float32),
                        jax.nn.sigmoid(x3).astype(jnp.float32),
                        atol=2e-2, rtol=2e-2), "bf16 mismatch"

    # Moderately larger activation to exercise the tiled / multi-step path.
    x4 = jax.random.normal(jax.random.PRNGKey(3), (4, 16, 32, 32), dtype=jnp.float32)
    y4 = jax.block_until_ready(pallas_sigmoid(x4))
    assert jnp.allclose(y4, jax.nn.sigmoid(x4), atol=1e-6, rtol=1e-6), "tiled mismatch"

    print("KERNEL_OK")
</pallas_src>

<mosaic_0001>
module attributes {stable_mosaic.version = 11 : i64} {
  func.func @_sigmoid_kernel(%arg0: i32, %arg1: memref<1x2048xf32, #tpu.memory_space<vmem>>, %arg2: memref<1x2048xf32, #tpu.memory_space<vmem>>) attributes {dimension_semantics = [#tpu.dimension_semantics<parallel>], iteration_bounds = array<i64: 1>, scalar_prefetch = 0 : i64, scratch_operands = 0 : i64, tpu.core_type = #tpu.core_type<tc>, window_params = [{transform_indices = @transform_0, window_bounds = array<i64: 1, 2048>}, {transform_indices = @transform_1, window_bounds = array<i64: 1, 2048>}]} {
    %c0 = arith.constant 0 : index
    %c0_0 = arith.constant 0 : index
    %0 = vector.load %arg1[%c0, %c0_0] : memref<1x2048xf32, #tpu.memory_space<vmem>>, vector<1x2048xf32>
    %cst = arith.constant 0.000000e+00 : f32
    %1 = vector.broadcast %cst : f32 to vector<1x2048xf32>
    %2 = arith.subf %1, %0 : vector<1x2048xf32>
    %3 = math.exp %2 : vector<1x2048xf32>
    %cst_1 = arith.constant 1.000000e+00 : f32
    %4 = vector.broadcast %cst_1 : f32 to vector<1x2048xf32>
    %5 = arith.addf %4, %3 : vector<1x2048xf32>
    %cst_2 = arith.constant 1.000000e+00 : f32
    %6 = vector.broadcast %cst_2 : f32 to vector<1x2048xf32>
    %7 = arith.divf %6, %5 : vector<1x2048xf32>
    %c0_3 = arith.constant 0 : index
    %c0_4 = arith.constant 0 : index
    %8 = vector.load %arg2[%c0_3, %c0_4] : memref<1x2048xf32, #tpu.memory_space<vmem>>, vector<1x2048xf32>
    tpu.vector_store %arg2[%c0_3, %c0_4], %7 {strides = array<i32>} : memref<1x2048xf32, #tpu.memory_space<vmem>>, vector<1x2048xf32>,
    return
  }
  func.func @transform_0(%arg0: i32) -> (i32, i32) {
    %c0_i32 = arith.constant 0 : i32
    %c0_i32_0 = arith.constant 0 : i32
    return %arg0, %c0_i32 : i32, i32
  }
  func.func @transform_1(%arg0: i32) -> (i32, i32) {
    %c0_i32 = arith.constant 0 : i32
    %c0_i32_0 = arith.constant 0 : i32
    return %arg0, %c0_i32 : i32, i32
  }
}

</mosaic_0001>

<llo_original>
// kernel: tpu_custom_call.1
$region0: #{tpu_custom_call.1}
  #allocation0 [shape = 'u32[]', space=smem, size = 0x4, offset = 0x4, fixed_abs, tag = 'smem constant byte address 0x4 - core index']
  #allocation1 [shape = 'u32[72,128]{1,0:T(1,128)}', space=vmem, size = 0x9000, scoped, tag = 'internal scratch']
  %s0 = inlined_call_operand.hbm [shape: f32[1,2048], index: 0, kind: input, shape index: {}]
  %s1 = inlined_call_operand.hbm [shape: f32[1,2048], index: 1, kind: output, shape index: {}]
  %s2 = sld [smem:[#allocation0]]
  $region18: #{tpu_custom_call.1} parent=0
    _
  %s4 = ssub.s32 1, %s2
  %s5 = scalar_select 0, %s4, %s2
  $region1: #{tpu_custom_call.1} parent=0
    #allocation2 [shape = 'u8[8192]{0}', space=vmem, size = 0x2000, scoped, tag = 'input window, operand 0, single buffered']
    #allocation3 [shape = 's32[1]{0}', space=sflag, size = 0x4, scoped, tag = 'scoped memory for tpu_custom_call.1']
    #allocation4 [shape = 's32[1]{0}', space=sflag, size = 0x4, scoped, tag = 'scoped memory for tpu_custom_call.1']
    #allocation5 [shape = 'u8[8192]{0}', space=vmem, size = 0x2000, scoped, tag = 'output window, operand 0, single buffered']
    %6 = vsyncpa [#allocation3], 0
    %7 = vsyncpa [#allocation4], 0
    // Predicated region
    $region2: #{tpu_custom_call.1} parent=1 // pred_check
      _
    $region3: #{tpu_custom_call.1} parent=1 // pred_check_branch
      %9 = sbr.rel (0) target = $region5
    $region4: #{tpu_custom_call.1} parent=1 // pred_region
      %11 = vsyncadd [#allocation3], 0
      %s13 = sshll.u32 %s0, 4
      %s14 = int_to_ptr.hbm [resolvable:$true] %s13
      %s15 = sshll.u32 [#allocation2], 4
      %s16 = int_to_ptr.vmem [resolvable:$true] %s15
      %18 = dma.hbm_to_vmem [thread:$0]  %s14, 256, %s16, [#allocation3]
    $region5: #{tpu_custom_call.1} parent=1 // pred_fallthru
      _
    // Predicated region
    $region6: #{tpu_custom_call.1} parent=1 // pred_check
      _
    $region7: #{tpu_custom_call.1} parent=1 // pred_check_branch
      %20 = sbr.rel (0) target = $region9
    $region8: #{tpu_custom_call.1} parent=1 // pred_region
      %22 = dma.done [#allocation3], 256
    $region9: #{tpu_custom_call.1} parent=1 // pred_fallthru
      _
    %v23 = vld [vmem:[#allocation2] sm:$0xff]
    %v24 = vld [vmem:[#allocation2 + $0x8] sm:$0xff]
    %v25 = vsub.f32 0.0, %v23
    %v26 = vsub.f32 0.0, %v24
    %v27 = vmul.f32 %v25, 1.442695
    %v28 = vpow.pop %v27
    %v29 = vmul.f32 %v26, 1.442695
    %v30 = vpow.pop %v29
    %v31 = vadd.f32 %v28, 1.0
    %v32 = vadd.f32 %v30, 1.0
    %v33 = vrcp.pop %v31
    %v34 = vmul.f32 %v31, %v33
    %v35 = vsub.f32 1.0, %v34
    %v36 = vmul.f32 %v33, %v35
    %v37 = vadd.f32 %v33, %v36
    %vm38 = vweird.f32 %v31
    %vm39 = vweird.f32 %v33
    %vm40 = vmor %vm38, %vm39
    %v41 = vsel %vm40, %v33, %v37
    %v42 = vand.u32 2147483647, %v31
    %vm43 = vcmp.eq.f32.partialorder %v42, 8.507059e+37
    %v44 = vand.u32 %v31, 2147483648
    %v45 = vor.u32 1.1754944e-38, %v44
    %v46 = vsel %vm43, %v45, %v41
    %v47 = vmul.f32 1.0, %v46
    %v48 = vrcp.pop %v32
    %v49 = vmul.f32 %v32, %v48
    %v50 = vsub.f32 1.0, %v49
    %v51 = vmul.f32 %v48, %v50
    %v52 = vadd.f32 %v48, %v51
    %vm53 = vweird.f32 %v32
    %vm54 = vweird.f32 %v48
    %vm55 = vmor %vm53, %vm54
    %v56 = vsel %vm55, %v48, %v52
    %v57 = vand.u32 2147483647, %v32
    %vm58 = vcmp.eq.f32.partialorder %v57, 8.507059e+37
    %v59 = vand.u32 %v32, 2147483648
    %v60 = vor.u32 1.1754944e-38, %v59
    %v61 = vsel %vm58, %v60, %v56
    %v62 = vmul.f32 1.0, %v61
    %63 = vst [vmem:[#allocation5] sm:$0xff] %v47
    %64 = vst [vmem:[#allocation5 + $0x8] sm:$0xff] %v62
    // Predicated region
    $region10: #{tpu_custom_call.1} parent=1 // pred_check
      _
    $region11: #{tpu_custom_call.1} parent=1 // pred_check_branch
      %66 = sbr.rel (0) target = $region13
    $region12: #{tpu_custom_call.1} parent=1 // pred_region
      %68 = vsyncadd [#allocation4], 0
      %s70 = sshll.u32 [#allocation5], 4
      %s71 = int_to_ptr.vmem [resolvable:$true] %s70
      %s72 = sshll.u32 %s1, 4
      %s73 = int_to_ptr.hbm [resolvable:$true] %s72
      %75 = dma.vmem_to_hbm [thread:$0]  %s71, 256, %s73, [#allocation4]
    $region13: #{tpu_custom_call.1} parent=1 // pred_fallthru
      _
    // Predicated region
    $region14: #{tpu_custom_call.1} parent=1 // pred_check
      _
    $region15: #{tpu_custom_call.1} parent=1 // pred_check_branch
      %77 = sbr.rel (0) target = $region17
    $region16: #{tpu_custom_call.1} parent=1 // pred_region
      %79 = dma.done [#allocation4], 256
    $region17: #{tpu_custom_call.1} parent=1 // pred_fallthru
      _
    %80 = vsyncpa [#allocation3], 1
    %81 = vsyncpa [#allocation4], 1

</llo_original>
